<compile_context>
chip_gen: v5e
topology: v5e:2x2
jax: 0.10.0
libtpu: 0.0.40
codegen_flags: <defaults>
</compile_context>

<pallas_src>
import jax
import jax.numpy as jnp
from jax import lax
from jax.experimental import pallas as pl
from jax.experimental.pallas import tpu as pltpu


def _round_up(x, m):
    return (x + m - 1) // m * m


def _choose_batch_tile(B, batch_tile):
    """Largest useful batch tile (MXU M-dim utilization), split into >= 2 grid
    steps when the batch is big enough so v7x's two TensorCores both get work."""
    tb = min(batch_tile, _round_up(max(B, 1), 8))
    if B > tb and _round_up(B, 8) < 2 * tb:
        tb = max(8, _round_up((B + 1) // 2, 8))
    return tb


def _vmem_limit_bytes():
    """~75% of physical VMEM; None (compiler default) if the HW query fails."""
    try:
        return int(pltpu.get_tpu_info().vmem_capacity_bytes * 3 // 4)
    except Exception:
        return None


def make_classifier_kernel(L, TB, Vp):
    inv_L = 1.0 / float(L)

    def kernel(ids_ref, emb_ref, wt_ref, b_ref, out_ref):
        # ids_ref: (TB, L)  int32   lane-dense token ids for this batch tile
        # emb_ref: (Vp, Ep) f32     padded embedding table (grid-invariant)
        # wt_ref : (Ep, Cp) f32     padded fc weight (already transposed)
        # b_ref  : (1, Cp)  f32     padded fc bias
        # out_ref: (TB, Cp) f32
        iota_v = lax.broadcasted_iota(jnp.int32, (TB, Vp), 1)        # hoisted once

        # counts[b, v] = #occurrences of token v in row b (raw integer counts).
        if L <= 16:
            # Small static L: fully unrolled Python loop (tiny, known-good codegen).
            ids = ids_ref[...]                                       # (TB, L)
            counts = jnp.zeros((TB, Vp), jnp.float32)
            for l in range(L):
                tok = ids[:, l:l + 1]                                # (TB, 1)
                counts = counts + (tok == iota_v).astype(jnp.float32)
        else:
            # Larger L: fori_loop bounds vreg live ranges; unroll keeps LLO
            # scheduling visibility.
            def body(l, counts):
                tok = ids_ref[:, pl.ds(l, 1)]                        # (TB, 1)
                return counts + (tok == iota_v).astype(jnp.float32)

            counts = lax.fori_loop(0, L, body,
                                   jnp.zeros((TB, Vp), jnp.float32),
                                   unroll=8)

        # Fused gather + mean-pool: one (TB,Vp) x (Vp,Ep) MXU contraction.
        # 1/L is applied to the small (TB, Ep) result, not the (TB, Vp) counts.
        mean_emb = jnp.dot(counts, emb_ref[...],
                           preferred_element_type=jnp.float32) * jnp.float32(inv_L)

        # Linear + sigmoid, lane-dense output slab.
        logits = jnp.dot(mean_emb, wt_ref[...],
                         preferred_element_type=jnp.float32) + b_ref[...]
        out_ref[...] = jax.nn.sigmoid(logits)

    return kernel


def text_classifier_forward(text, emb_table, fc_w, fc_b, *, batch_tile=128):
    """text: (B, L) int32; emb_table: (V, E); fc_w: (C, E) (PyTorch layout); fc_b: (C,)."""
    B, L = text.shape
    V, E = emb_table.shape
    C = fc_w.shape[0]

    # Lane/sublane-friendly padded sizes (sliced off after the call).
    Vp = _round_up(max(V, 128), 128)
    Ep = _round_up(max(E, 128), 128)
    Cp = _round_up(max(C, 128), 128)
    TB = _choose_batch_tile(B, batch_tile)
    Bp = _round_up(max(B, TB), TB)

    ids = jnp.zeros((Bp, L), jnp.int32).at[:B].set(text.astype(jnp.int32))
    emb_p = jnp.zeros((Vp, Ep), jnp.float32).at[:V, :E].set(emb_table.astype(jnp.float32))
    wt_p = jnp.zeros((Ep, Cp), jnp.float32).at[:E, :C].set(fc_w.T.astype(jnp.float32))
    b_p = jnp.zeros((1, Cp), jnp.float32).at[0, :C].set(fc_b.astype(jnp.float32))

    kernel = make_classifier_kernel(L, TB, Vp)
    grid = (Bp // TB,)

    cost = pl.CostEstimate(
        flops=2 * Bp * Vp * Ep + 2 * Bp * Ep * Cp,
        transcendentals=Bp * Cp,                                  # sigmoid exp
        bytes_accessed=4 * (ids.size + emb_p.size + wt_p.size + b_p.size + Bp * Cp),
    )
    compiler_params = pltpu.CompilerParams(
        dimension_semantics=("parallel",),
        vmem_limit_bytes=_vmem_limit_bytes(),
    )

    def build(single_buffer_consts):
        # Grid-invariant operands never re-fetch; single-buffer them to halve
        # their VMEM footprint (critical on v7x's 64 MiB per-TC VMEM).
        const_kw = {"pipeline_mode": pl.Buffered(1)} if single_buffer_consts else {}
        return pl.pallas_call(
            kernel,
            out_shape=jax.ShapeDtypeStruct((Bp, Cp), jnp.float32),
            grid=grid,
            in_specs=[
                pl.BlockSpec((TB, L), lambda i: (i, 0)),                # ids: tiled over batch
                pl.BlockSpec((Vp, Ep), lambda i: (0, 0), **const_kw),   # emb table
                pl.BlockSpec((Ep, Cp), lambda i: (0, 0), **const_kw),   # fc weight
                pl.BlockSpec((1, Cp), lambda i: (0, 0), **const_kw),    # fc bias
            ],
            out_specs=pl.BlockSpec((TB, Cp), lambda i: (i, 0)),
            compiler_params=compiler_params,
            cost_estimate=cost,
        )

    try:
        out_p = build(True)(ids, emb_p, wt_p, b_p)
    except Exception:
        # Some jax versions reject buffer_count=1; fall back to default
        # (double-buffered) specs for the grid-invariant operands.
        out_p = build(False)(ids, emb_p, wt_p, b_p)

    return out_p[:B, :C]


if __name__ == "__main__":
    # Small shapes consistent with the module.
    vocab_size, embed_dim, num_classes = 32, 32, 8
    batch, seq = 2, 8

    key = jax.random.PRNGKey(0)
    k_ids, k_emb, k_w, k_b = jax.random.split(key, 4)

    # Deterministic parameter init (mirrors PyTorch defaults: N(0,1) embedding,
    # U(-1/sqrt(E), 1/sqrt(E)) for the linear layer).
    emb_table = jax.random.normal(k_emb, (vocab_size, embed_dim), jnp.float32)
    bound = 1.0 / jnp.sqrt(embed_dim)
    fc_w = jax.random.uniform(k_w, (num_classes, embed_dim), jnp.float32, -bound, bound)
    fc_b = jax.random.uniform(k_b, (num_classes,), jnp.float32, -bound, bound)

    text = jax.random.randint(k_ids, (batch, seq), 0, vocab_size, jnp.int32)

    out = text_classifier_forward(text, emb_table, fc_w, fc_b)
    out = jax.block_until_ready(out)

    # Pure-JAX reference for correctness.
    ref = jax.nn.sigmoid(emb_table[text].mean(axis=1) @ fc_w.T + fc_b)
    assert out.shape == (batch, num_classes)
    assert jnp.allclose(out, ref, atol=1e-5, rtol=1e-5)

    print("KERNEL_OK")
</pallas_src>

<mosaic_0001>
module attributes {stable_mosaic.version = 11 : i64} {
  func.func @kernel(%arg0: i32, %arg1: memref<8x8xi32, #tpu.memory_space<vmem>>, %arg2: memref<128x128xf32, #tpu.memory_space<vmem>>, %arg3: memref<128x128xf32, #tpu.memory_space<vmem>>, %arg4: memref<1x128xf32, #tpu.memory_space<vmem>>, %arg5: memref<8x128xf32, #tpu.memory_space<vmem>>) attributes {dimension_semantics = [#tpu.dimension_semantics<parallel>], iteration_bounds = array<i64: 1>, scalar_prefetch = 0 : i64, scratch_operands = 0 : i64, tpu.core_type = #tpu.core_type<tc>, window_params = [{transform_indices = @transform_0, window_bounds = array<i64: 8, 8>}, {pipeline_mode = #tpu.pipeline_mode<synchronous>, transform_indices = @transform_1, window_bounds = array<i64: 128, 128>}, {pipeline_mode = #tpu.pipeline_mode<synchronous>, transform_indices = @transform_2, window_bounds = array<i64: 128, 128>}, {pipeline_mode = #tpu.pipeline_mode<synchronous>, transform_indices = @transform_3, window_bounds = array<i64: 1, 128>}, {transform_indices = @transform_4, window_bounds = array<i64: 8, 128>}]} {
    %0 = tpu.iota {dimensions = array<i32: 1>} : vector<8x128xi32>
    %c0 = arith.constant 0 : index
    %c0_0 = arith.constant 0 : index
    %1 = vector.load %arg1[%c0, %c0_0] : memref<8x8xi32, #tpu.memory_space<vmem>>, vector<8x8xi32>
    %cst = arith.constant 0.000000e+00 : f32
    %2 = vector.broadcast %cst : f32 to vector<8x128xf32>
    %3 = vector.extract_strided_slice %1 {offsets = [0, 0], sizes = [8, 1], strides = [1, 1]} : vector<8x8xi32> to vector<8x1xi32>
    %4 = vector.broadcast %3 : vector<8x1xi32> to vector<8x128xi32>
    %5 = arith.cmpi eq, %4, %0 : vector<8x128xi32>
    %6 = arith.extui %5 : vector<8x128xi1> to vector<8x128xi32>
    %7 = arith.sitofp %6 : vector<8x128xi32> to vector<8x128xf32>
    %8 = arith.addf %2, %7 : vector<8x128xf32>
    %9 = vector.extract_strided_slice %1 {offsets = [0, 1], sizes = [8, 1], strides = [1, 1]} : vector<8x8xi32> to vector<8x1xi32>
    %10 = vector.broadcast %9 : vector<8x1xi32> to vector<8x128xi32>
    %11 = arith.cmpi eq, %10, %0 : vector<8x128xi32>
    %12 = arith.extui %11 : vector<8x128xi1> to vector<8x128xi32>
    %13 = arith.sitofp %12 : vector<8x128xi32> to vector<8x128xf32>
    %14 = arith.addf %8, %13 : vector<8x128xf32>
    %15 = vector.extract_strided_slice %1 {offsets = [0, 2], sizes = [8, 1], strides = [1, 1]} : vector<8x8xi32> to vector<8x1xi32>
    %16 = vector.broadcast %15 : vector<8x1xi32> to vector<8x128xi32>
    %17 = arith.cmpi eq, %16, %0 : vector<8x128xi32>
    %18 = arith.extui %17 : vector<8x128xi1> to vector<8x128xi32>
    %19 = arith.sitofp %18 : vector<8x128xi32> to vector<8x128xf32>
    %20 = arith.addf %14, %19 : vector<8x128xf32>
    %21 = vector.extract_strided_slice %1 {offsets = [0, 3], sizes = [8, 1], strides = [1, 1]} : vector<8x8xi32> to vector<8x1xi32>
    %22 = vector.broadcast %21 : vector<8x1xi32> to vector<8x128xi32>
    %23 = arith.cmpi eq, %22, %0 : vector<8x128xi32>
    %24 = arith.extui %23 : vector<8x128xi1> to vector<8x128xi32>
    %25 = arith.sitofp %24 : vector<8x128xi32> to vector<8x128xf32>
    %26 = arith.addf %20, %25 : vector<8x128xf32>
    %27 = vector.extract_strided_slice %1 {offsets = [0, 4], sizes = [8, 1], strides = [1, 1]} : vector<8x8xi32> to vector<8x1xi32>
    %28 = vector.broadcast %27 : vector<8x1xi32> to vector<8x128xi32>
    %29 = arith.cmpi eq, %28, %0 : vector<8x128xi32>
    %30 = arith.extui %29 : vector<8x128xi1> to vector<8x128xi32>
    %31 = arith.sitofp %30 : vector<8x128xi32> to vector<8x128xf32>
    %32 = arith.addf %26, %31 : vector<8x128xf32>
    %33 = vector.extract_strided_slice %1 {offsets = [0, 5], sizes = [8, 1], strides = [1, 1]} : vector<8x8xi32> to vector<8x1xi32>
    %34 = vector.broadcast %33 : vector<8x1xi32> to vector<8x128xi32>
    %35 = arith.cmpi eq, %34, %0 : vector<8x128xi32>
    %36 = arith.extui %35 : vector<8x128xi1> to vector<8x128xi32>
    %37 = arith.sitofp %36 : vector<8x128xi32> to vector<8x128xf32>
    %38 = arith.addf %32, %37 : vector<8x128xf32>
    %39 = vector.extract_strided_slice %1 {offsets = [0, 6], sizes = [8, 1], strides = [1, 1]} : vector<8x8xi32> to vector<8x1xi32>
    %40 = vector.broadcast %39 : vector<8x1xi32> to vector<8x128xi32>
    %41 = arith.cmpi eq, %40, %0 : vector<8x128xi32>
    %42 = arith.extui %41 : vector<8x128xi1> to vector<8x128xi32>
    %43 = arith.sitofp %42 : vector<8x128xi32> to vector<8x128xf32>
    %44 = arith.addf %38, %43 : vector<8x128xf32>
    %45 = vector.extract_strided_slice %1 {offsets = [0, 7], sizes = [8, 1], strides = [1, 1]} : vector<8x8xi32> to vector<8x1xi32>
    %46 = vector.broadcast %45 : vector<8x1xi32> to vector<8x128xi32>
    %47 = arith.cmpi eq, %46, %0 : vector<8x128xi32>
    %48 = arith.extui %47 : vector<8x128xi1> to vector<8x128xi32>
    %49 = arith.sitofp %48 : vector<8x128xi32> to vector<8x128xf32>
    %50 = arith.addf %44, %49 : vector<8x128xf32>
    %c0_1 = arith.constant 0 : index
    %c0_2 = arith.constant 0 : index
    %51 = vector.load %arg2[%c0_1, %c0_2] : memref<128x128xf32, #tpu.memory_space<vmem>>, vector<128x128xf32>
    %cst_3 = arith.constant dense<0.000000e+00> : vector<8x128xf32>
    %52 = tpu.matmul %50, %51, %cst_3 {dimension_numbers = #tpu.dot_dimension_numbers<[1], [0], [0], [1], [0, 0, 1, 1], [], []>} : vector<8x128xf32>, vector<128x128xf32>, vector<8x128xf32> -> vector<8x128xf32>
    %cst_4 = arith.constant 1.250000e-01 : f32
    %53 = vector.broadcast %cst_4 : f32 to vector<8x128xf32>
    %54 = arith.mulf %52, %53 : vector<8x128xf32>
    %c0_5 = arith.constant 0 : index
    %c0_6 = arith.constant 0 : index
    %55 = vector.load %arg3[%c0_5, %c0_6] : memref<128x128xf32, #tpu.memory_space<vmem>>, vector<128x128xf32>
    %cst_7 = arith.constant dense<0.000000e+00> : vector<8x128xf32>
    %56 = tpu.matmul %54, %55, %cst_7 {dimension_numbers = #tpu.dot_dimension_numbers<[1], [0], [0], [1], [0, 0, 1, 1], [], []>} : vector<8x128xf32>, vector<128x128xf32>, vector<8x128xf32> -> vector<8x128xf32>
    %c0_8 = arith.constant 0 : index
    %c0_9 = arith.constant 0 : index
    %57 = vector.load %arg4[%c0_8, %c0_9] : memref<1x128xf32, #tpu.memory_space<vmem>>, vector<1x128xf32>
    %58 = vector.broadcast %57 : vector<1x128xf32> to vector<8x128xf32>
    %59 = arith.addf %56, %58 : vector<8x128xf32>
    %60 = arith.negf %59 : vector<8x128xf32>
    %61 = math.exp %60 : vector<8x128xf32>
    %cst_10 = arith.constant 1.000000e+00 : f32
    %62 = vector.broadcast %cst_10 : f32 to vector<8x128xf32>
    %63 = arith.addf %62, %61 : vector<8x128xf32>
    %64 = arith.divf %62, %63 : vector<8x128xf32>
    %c0_11 = arith.constant 0 : index
    %c0_12 = arith.constant 0 : index
    %65 = vector.load %arg5[%c0_11, %c0_12] : memref<8x128xf32, #tpu.memory_space<vmem>>, vector<8x128xf32>
    tpu.vector_store %arg5[%c0_11, %c0_12], %64 {strides = array<i32>} : memref<8x128xf32, #tpu.memory_space<vmem>>, vector<8x128xf32>,
    return
  }
  func.func @transform_0(%arg0: i32) -> (i32, i32) {
    %c0_i32 = arith.constant 0 : i32
    %c0_i32_0 = arith.constant 0 : i32
    return %arg0, %c0_i32 : i32, i32
  }
  func.func @transform_1(%arg0: i32) -> (i32, i32) {
    %c0_i32 = arith.constant 0 : i32
    %c0_i32_0 = arith.constant 0 : i32
    %c0_i32_1 = arith.constant 0 : i32
    return %c0_i32, %c0_i32_0 : i32, i32
  }
  func.func @transform_2(%arg0: i32) -> (i32, i32) {
    %c0_i32 = arith.constant 0 : i32
    %c0_i32_0 = arith.constant 0 : i32
    %c0_i32_1 = arith.constant 0 : i32
    return %c0_i32, %c0_i32_0 : i32, i32
  }
  func.func @transform_3(%arg0: i32) -> (i32, i32) {
    %c0_i32 = arith.constant 0 : i32
    %c0_i32_0 = arith.constant 0 : i32
    %c0_i32_1 = arith.constant 0 : i32
    return %c0_i32, %c0_i32_0 : i32, i32
  }
  func.func @transform_4(%arg0: i32) -> (i32, i32) {
    %c0_i32 = arith.constant 0 : i32
    %c0_i32_0 = arith.constant 0 : i32
    return %arg0, %c0_i32 : i32, i32
  }
}

module attributes {stable_mosaic.version = 11 : i64} {
  func.func @kernel(%arg0: i32, %arg1: memref<8x8xi32, #tpu.memory_space<vmem>>, %arg2: memref<128x128xf32, #tpu.memory_space<vmem>>, %arg3: memref<128x128xf32, #tpu.memory_space<vmem>>, %arg4: memref<1x128xf32, #tpu.memory_space<vmem>>, %arg5: memref<8x128xf32, #tpu.memory_space<vmem>>) attributes {dimension_semantics = [#tpu.dimension_semantics<parallel>], iteration_bounds = array<i64: 1>, scalar_prefetch = 0 : i64, scratch_operands = 0 : i64, tpu.core_type = #tpu.core_type<tc>, window_params = [{transform_indices = @transform_0, window_bounds = array<i64: 8, 8>}, {pipeline_mode = #tpu.pipeline_mode<synchronous>, transform_indices = @transform_1, window_bounds = array<i64: 128, 128>}, {pipeline_mode = #tpu.pipeline_mode<synchronous>, transform_indices = @transform_2, window_bounds = array<i64: 128, 128>}, {pipeline_mode = #tpu.pipeline_mode<synchronous>, transform_indices = @transform_3, window_bounds = array<i64: 1, 128>}, {transform_indices = @transform_4, window_bounds = array<i64: 8, 128>}]} {
    %0 = tpu.iota {dimensions = array<i32: 1>} : vector<8x128xi32>
    %c0 = arith.constant 0 : index
    %c0_0 = arith.constant 0 : index
    %1 = vector.load %arg1[%c0, %c0_0] : memref<8x8xi32, #tpu.memory_space<vmem>>, vector<8x8xi32>
    %cst = arith.constant 0.000000e+00 : f32
    %2 = vector.broadcast %cst : f32 to vector<8x128xf32>
    %3 = vector.extract_strided_slice %1 {offsets = [0, 0], sizes = [8, 1], strides = [1, 1]} : vector<8x8xi32> to vector<8x1xi32>
    %4 = vector.broadcast %3 : vector<8x1xi32> to vector<8x128xi32>
    %5 = arith.cmpi eq, %4, %0 : vector<8x128xi32>
    %6 = arith.extui %5 : vector<8x128xi1> to vector<8x128xi32>
    %7 = arith.sitofp %6 : vector<8x128xi32> to vector<8x128xf32>
    %8 = arith.addf %2, %7 : vector<8x128xf32>
    %9 = vector.extract_strided_slice %1 {offsets = [0, 1], sizes = [8, 1], strides = [1, 1]} : vector<8x8xi32> to vector<8x1xi32>
    %10 = vector.broadcast %9 : vector<8x1xi32> to vector<8x128xi32>
    %11 = arith.cmpi eq, %10, %0 : vector<8x128xi32>
    %12 = arith.extui %11 : vector<8x128xi1> to vector<8x128xi32>
    %13 = arith.sitofp %12 : vector<8x128xi32> to vector<8x128xf32>
    %14 = arith.addf %8, %13 : vector<8x128xf32>
    %15 = vector.extract_strided_slice %1 {offsets = [0, 2], sizes = [8, 1], strides = [1, 1]} : vector<8x8xi32> to vector<8x1xi32>
    %16 = vector.broadcast %15 : vector<8x1xi32> to vector<8x128xi32>
    %17 = arith.cmpi eq, %16, %0 : vector<8x128xi32>
    %18 = arith.extui %17 : vector<8x128xi1> to vector<8x128xi32>
    %19 = arith.sitofp %18 : vector<8x128xi32> to vector<8x128xf32>
    %20 = arith.addf %14, %19 : vector<8x128xf32>
    %21 = vector.extract_strided_slice %1 {offsets = [0, 3], sizes = [8, 1], strides = [1, 1]} : vector<8x8xi32> to vector<8x1xi32>
    %22 = vector.broadcast %21 : vector<8x1xi32> to vector<8x128xi32>
    %23 = arith.cmpi eq, %22, %0 : vector<8x128xi32>
    %24 = arith.extui %23 : vector<8x128xi1> to vector<8x128xi32>
    %25 = arith.sitofp %24 : vector<8x128xi32> to vector<8x128xf32>
    %26 = arith.addf %20, %25 : vector<8x128xf32>
    %27 = vector.extract_strided_slice %1 {offsets = [0, 4], sizes = [8, 1], strides = [1, 1]} : vector<8x8xi32> to vector<8x1xi32>
    %28 = vector.broadcast %27 : vector<8x1xi32> to vector<8x128xi32>
    %29 = arith.cmpi eq, %28, %0 : vector<8x128xi32>
    %30 = arith.extui %29 : vector<8x128xi1> to vector<8x128xi32>
    %31 = arith.sitofp %30 : vector<8x128xi32> to vector<8x128xf32>
    %32 = arith.addf %26, %31 : vector<8x128xf32>
    %33 = vector.extract_strided_slice %1 {offsets = [0, 5], sizes = [8, 1], strides = [1, 1]} : vector<8x8xi32> to vector<8x1xi32>
    %34 = vector.broadcast %33 : vector<8x1xi32> to vector<8x128xi32>
    %35 = arith.cmpi eq, %34, %0 : vector<8x128xi32>
    %36 = arith.extui %35 : vector<8x128xi1> to vector<8x128xi32>
    %37 = arith.sitofp %36 : vector<8x128xi32> to vector<8x128xf32>
    %38 = arith.addf %32, %37 : vector<8x128xf32>
    %39 = vector.extract_strided_slice %1 {offsets = [0, 6], sizes = [8, 1], strides = [1, 1]} : vector<8x8xi32> to vector<8x1xi32>
    %40 = vector.broadcast %39 : vector<8x1xi32> to vector<8x128xi32>
    %41 = arith.cmpi eq, %40, %0 : vector<8x128xi32>
    %42 = arith.extui %41 : vector<8x128xi1> to vector<8x128xi32>
    %43 = arith.sitofp %42 : vector<8x128xi32> to vector<8x128xf32>
    %44 = arith.addf %38, %43 : vector<8x128xf32>
    %45 = vector.extract_strided_slice %1 {offsets = [0, 7], sizes = [8, 1], strides = [1, 1]} : vector<8x8xi32> to vector<8x1xi32>
    %46 = vector.broadcast %45 : vector<8x1xi32> to vector<8x128xi32>
    %47 = arith.cmpi eq, %46, %0 : vector<8x128xi32>
    %48 = arith.extui %47 : vector<8x128xi1> to vector<8x128xi32>
    %49 = arith.sitofp %48 : vector<8x128xi32> to vector<8x128xf32>
    %50 = arith.addf %44, %49 : vector<8x128xf32>
    %c0_1 = arith.constant 0 : index
    %c0_2 = arith.constant 0 : index
    %51 = vector.load %arg2[%c0_1, %c0_2] : memref<128x128xf32, #tpu.memory_space<vmem>>, vector<128x128xf32>
    %cst_3 = arith.constant dense<0.000000e+00> : vector<8x128xf32>
    %52 = tpu.matmul %50, %51, %cst_3 {dimension_numbers = #tpu.dot_dimension_numbers<[1], [0], [0], [1], [0, 0, 1, 1], [], []>} : vector<8x128xf32>, vector<128x128xf32>, vector<8x128xf32> -> vector<8x128xf32>
    %cst_4 = arith.constant 1.250000e-01 : f32
    %53 = vector.broadcast %cst_4 : f32 to vector<8x128xf32>
    %54 = arith.mulf %52, %53 : vector<8x128xf32>
    %c0_5 = arith.constant 0 : index
    %c0_6 = arith.constant 0 : index
    %55 = vector.load %arg3[%c0_5, %c0_6] : memref<128x128xf32, #tpu.memory_space<vmem>>, vector<128x128xf32>
    %cst_7 = arith.constant dense<0.000000e+00> : vector<8x128xf32>
    %56 = tpu.matmul %54, %55, %cst_7 {dimension_numbers = #tpu.dot_dimension_numbers<[1], [0], [0], [1], [0, 0, 1, 1], [], []>} : vector<8x128xf32>, vector<128x128xf32>, vector<8x128xf32> -> vector<8x128xf32>
    %c0_8 = arith.constant 0 : index
    %c0_9 = arith.constant 0 : index
    %57 = vector.load %arg4[%c0_8, %c0_9] : memref<1x128xf32, #tpu.memory_space<vmem>>, vector<1x128xf32>
    %58 = vector.broadcast %57 : vector<1x128xf32> to vector<8x128xf32>
    %59 = arith.addf %56, %58 : vector<8x128xf32>
    %60 = arith.negf %59 : vector<8x128xf32>
    %61 = math.exp %60 : vector<8x128xf32>
    %cst_10 = arith.constant 1.000000e+00 : f32
    %62 = vector.broadcast %cst_10 : f32 to vector<8x128xf32>
    %63 = arith.addf %62, %61 : vector<8x128xf32>
    %64 = arith.divf %62, %63 : vector<8x128xf32>
    %c0_11 = arith.constant 0 : index
    %c0_12 = arith.constant 0 : index
    %65 = vector.load %arg5[%c0_11, %c0_12] : memref<8x128xf32, #tpu.memory_space<vmem>>, vector<8x128xf32>
    tpu.vector_store %arg5[%c0_11, %c0_12], %64 {strides = array<i32>} : memref<8x128xf32, #tpu.memory_space<vmem>>, vector<8x128xf32>,
    return
  }
  func.func @transform_0(%arg0: i32) -> (i32, i32) {
    %c0_i32 = arith.constant 0 : i32
    %c0_i32_0 = arith.constant 0 : i32
    return %arg0, %c0_i32 : i32, i32
  }
  func.func @transform_1(%arg0: i32) -> (i32, i32) {
    %c0_i32 = arith.constant 0 : i32
    %c0_i32_0 = arith.constant 0 : i32
    %c0_i32_1 = arith.constant 0 : i32
    return %c0_i32, %c0_i32_0 : i32, i32
  }
  func.func @transform_2(%arg0: i32) -> (i32, i32) {
    %c0_i32 = arith.constant 0 : i32
    %c0_i32_0 = arith.constant 0 : i32
    %c0_i32_1 = arith.constant 0 : i32
    return %c0_i32, %c0_i32_0 : i32, i32
  }
  func.func @transform_3(%arg0: i32) -> (i32, i32) {
    %c0_i32 = arith.constant 0 : i32
    %c0_i32_0 = arith.constant 0 : i32
    %c0_i32_1 = arith.constant 0 : i32
    return %c0_i32, %c0_i32_0 : i32, i32
  }
  func.func @transform_4(%arg0: i32) -> (i32, i32) {
    %c0_i32 = arith.constant 0 : i32
    %c0_i32_0 = arith.constant 0 : i32
    return %arg0, %c0_i32 : i32, i32
  }
}

</mosaic_0001>

<llo_original>
// kernel: tpu_custom_call.1
$region0: #{tpu_custom_call.1}
  #allocation0 [shape = 'u32[]', space=smem, size = 0x4, offset = 0x4, fixed_abs, tag = 'smem constant byte address 0x4 - core index']
  #allocation1 [shape = 'u32[72,128]{1,0:T(1,128)}', space=vmem, size = 0x9000, scoped, tag = 'internal scratch']
  %s0 = inlined_call_operand.hbm [shape: s32[8,8], index: 0, kind: input, shape index: {}]
  %s1 = inlined_call_operand.hbm [shape: f32[128,128], index: 1, kind: input, shape index: {}]
  %s2 = inlined_call_operand.hbm [shape: f32[128,128], index: 2, kind: input, shape index: {}]
  %s3 = inlined_call_operand.vmem [shape: f32[1,128], index: 3, kind: input, shape index: {}]
  %s4 = inlined_call_operand.hbm [shape: f32[8,128], index: 4, kind: output, shape index: {}]
  %s5 = sld [smem:[#allocation0]]
  $region38: #{tpu_custom_call.1} parent=0
    _
  %s7 = ssub.s32 1, %s5
  %s8 = scalar_select 0, %s7, %s5
  $region1: #{tpu_custom_call.1} parent=0
    #allocation2 [shape = 'u8[4096]{0}', space=vmem, size = 0x1000, scoped, tag = 'input window, operand 0, single buffered']
    #allocation3 [shape = 's32[1]{0}', space=sflag, size = 0x4, scoped, tag = 'scoped memory for tpu_custom_call.1']
    #allocation4 [shape = 's32[1]{0}', space=sflag, size = 0x4, scoped, tag = 'scoped memory for tpu_custom_call.1']
    #allocation5 [shape = 'u8[65536]{0}', space=vmem, size = 0x10000, scoped, tag = 'input window, operand 1, single buffered']
    #allocation6 [shape = 's32[1]{0}', space=sflag, size = 0x4, scoped, tag = 'scoped memory for tpu_custom_call.1']
    #allocation7 [shape = 'u8[65536]{0}', space=vmem, size = 0x10000, scoped, tag = 'input window, operand 2, single buffered']
    #allocation8 [shape = 'u8[4096]{0}', space=vmem, size = 0x1000, scoped, tag = 'output window, operand 0, single buffered']
    %9 = vsyncpa [#allocation3], 0
    %10 = vsyncpa [#allocation6], 0
    %11 = vsyncpa [#allocation4], 0
    // Predicated region
    $region2: #{tpu_custom_call.1} parent=1 // pred_check
      _
    $region3: #{tpu_custom_call.1} parent=1 // pred_check_branch
      %13 = sbr.rel (0) target = $region5
    $region4: #{tpu_custom_call.1} parent=1 // pred_region
      %15 = vsyncadd [#allocation3], 0
      %s17 = sshll.u32 %s0, 4
      %s18 = int_to_ptr.hbm [resolvable:$true] %s17
      %s19 = sshll.u32 [#allocation2], 4
      %s20 = int_to_ptr.vmem [resolvable:$true] %s19
      %22 = dma.hbm_to_vmem [thread:$0]  %s18, 128, %s20, [#allocation3]
    $region5: #{tpu_custom_call.1} parent=1 // pred_fallthru
      _
    // Predicated region
    $region6: #{tpu_custom_call.1} parent=1 // pred_check
      _
    $region7: #{tpu_custom_call.1} parent=1 // pred_check_branch
      %24 = sbr.rel (0) target = $region9
    $region8: #{tpu_custom_call.1} parent=1 // pred_region
      %26 = vsyncadd [#allocation6], 0
      %s27 = sshll.u32 %s1, 4
      %s28 = int_to_ptr.hbm [resolvable:$true] %s27
      %s29 = sshll.u32 [#allocation5], 4
      %s30 = int_to_ptr.vmem [resolvable:$true] %s29
      %35 = dma.hbm_to_vmem [thread:$0]  %s28, 2048, %s30, [#allocation6], 128, 128, 8
    $region9: #{tpu_custom_call.1} parent=1 // pred_fallthru
      _
    // Predicated region
    $region10: #{tpu_custom_call.1} parent=1 // pred_check
      _
    $region11: #{tpu_custom_call.1} parent=1 // pred_check_branch
      %37 = sbr.rel (0) target = $region13
    $region12: #{tpu_custom_call.1} parent=1 // pred_region
      %39 = vsyncadd [#allocation6], 0
      %s40 = sshll.u32 %s2, 4
      %s41 = int_to_ptr.hbm [resolvable:$true] %s40
      %s42 = sshll.u32 [#allocation7], 4
      %s43 = int_to_ptr.vmem [resolvable:$true] %s42
      %48 = dma.hbm_to_vmem [thread:$0]  %s41, 2048, %s43, [#allocation6], 128, 128, 8
    $region13: #{tpu_custom_call.1} parent=1 // pred_fallthru
      _
    // Predicated region
    $region14: #{tpu_custom_call.1} parent=1 // pred_check
      _
    $region15: #{tpu_custom_call.1} parent=1 // pred_check_branch
      %50 = sbr.rel (0) target = $region17
    $region16: #{tpu_custom_call.1} parent=1 // pred_region
      _
    $region17: #{tpu_custom_call.1} parent=1 // pred_fallthru
      _
    // Predicated region
    $region18: #{tpu_custom_call.1} parent=1 // pred_check
      _
    $region19: #{tpu_custom_call.1} parent=1 // pred_check_branch
      %52 = sbr.rel (0) target = $region21
    $region20: #{tpu_custom_call.1} parent=1 // pred_region
      %54 = dma.done [#allocation3], 128
    $region21: #{tpu_custom_call.1} parent=1 // pred_fallthru
      _
    // Predicated region
    $region22: #{tpu_custom_call.1} parent=1 // pred_check
      _
    $region23: #{tpu_custom_call.1} parent=1 // pred_check_branch
      %56 = sbr.rel (0) target = $region25
    $region24: #{tpu_custom_call.1} parent=1 // pred_region
      %58 = dma.done [#allocation6], 2048
    $region25: #{tpu_custom_call.1} parent=1 // pred_fallthru
      _
    // Predicated region
    $region26: #{tpu_custom_call.1} parent=1 // pred_check
      _
    $region27: #{tpu_custom_call.1} parent=1 // pred_check_branch
      %60 = sbr.rel (0) target = $region29
    $region28: #{tpu_custom_call.1} parent=1 // pred_region
      %62 = dma.done [#allocation6], 2048
    $region29: #{tpu_custom_call.1} parent=1 // pred_fallthru
      _
    %v63 = vlaneseq
    %v64 = vand.u32 %v63, 127
    %v65 = vld [vmem:[#allocation2] sm:$0xff]
    %66 = vset.pattern.permute.xlu0 0
    %67 = vperm.xlu0 %66, %v65
    %v68 = vpop.permute.xlu0 %67
    %vm69 = vcmp.eq.s32.totalorder %v68, %v64
    %v70 = vsel %vm69, 1, 0
    %v71 = vcvt.s32.f32 %v70
    %v72 = vadd.f32 %v71, 0.0
    %73 = vset.pattern.permute.xlu0 1
    %74 = vperm.xlu0 %73, %v65
    %v75 = vpop.permute.xlu0 %74
    %vm76 = vcmp.eq.s32.totalorder %v75, %v64
    %v77 = vsel %vm76, 1, 0
    %v78 = vcvt.s32.f32 %v77
    %v79 = vadd.f32 %v72, %v78
    %80 = vset.pattern.permute.xlu0 2
    %81 = vperm.xlu0 %80, %v65
    %v82 = vpop.permute.xlu0 %81
    %vm83 = vcmp.eq.s32.totalorder %v82, %v64
    %v84 = vsel %vm83, 1, 0
    %v85 = vcvt.s32.f32 %v84
    %v86 = vadd.f32 %v79, %v85
    %87 = vset.pattern.permute.xlu0 3
    %88 = vperm.xlu0 %87, %v65
    %v89 = vpop.permute.xlu0 %88
    %vm90 = vcmp.eq.s32.totalorder %v89, %v64
    %v91 = vsel %vm90, 1, 0
    %v92 = vcvt.s32.f32 %v91
    %v93 = vadd.f32 %v86, %v92
    %94 = vset.pattern.permute.xlu0 4
    %95 = vperm.xlu0 %94, %v65
    %v96 = vpop.permute.xlu0 %95
    %vm97 = vcmp.eq.s32.totalorder %v96, %v64
    %v98 = vsel %vm97, 1, 0
    %v99 = vcvt.s32.f32 %v98
    %v100 = vadd.f32 %v93, %v99
    %101 = vset.pattern.permute.xlu0 5
    %102 = vperm.xlu0 %101, %v65
    %v103 = vpop.permute.xlu0 %102
    %vm104 = vcmp.eq.s32.totalorder %v103, %v64
    %v105 = vsel %vm104, 1, 0
    %v106 = vcvt.s32.f32 %v105
    %v107 = vadd.f32 %v100, %v106
    %108 = vset.pattern.permute.xlu0 6
    %109 = vperm.xlu0 %108, %v65
    %v110 = vpop.permute.xlu0 %109
    %vm111 = vcmp.eq.s32.totalorder %v110, %v64
    %v112 = vsel %vm111, 1, 0
    %v113 = vcvt.s32.f32 %v112
    %v114 = vadd.f32 %v107, %v113
    %115 = vset.pattern.permute.xlu0 7
    %116 = vperm.xlu0 %115, %v65
    %v117 = vpop.permute.xlu0 %116
    %vm118 = vcmp.eq.s32.totalorder %v117, %v64
    %v119 = vsel %vm118, 1, 0
    %v120 = vcvt.s32.f32 %v119
    %v121 = vadd.f32 %v114, %v120
    %v122 = vld [vmem:[#allocation5] sm:$0xff]
    %v123 = vld [vmem:[#allocation5 + $0x8] sm:$0xff]
    %v124 = vld [vmem:[#allocation5 + $0x10] sm:$0xff]
    %v125 = vld [vmem:[#allocation5 + $0x18] sm:$0xff]
    %v126 = vld [vmem:[#allocation5 + $0x20] sm:$0xff]
    %v127 = vld [vmem:[#allocation5 + $0x28] sm:$0xff]
    %v128 = vld [vmem:[#allocation5 + $0x30] sm:$0xff]
    %v129 = vld [vmem:[#allocation5 + $0x38] sm:$0xff]
    %v130 = vld [vmem:[#allocation5 + $0x40] sm:$0xff]
    %v131 = vld [vmem:[#allocation5 + $0x48] sm:$0xff]
    %v132 = vld [vmem:[#allocation5 + $0x50] sm:$0xff]
    %v133 = vld [vmem:[#allocation5 + $0x58] sm:$0xff]
    %v134 = vld [vmem:[#allocation5 + $0x60] sm:$0xff]
    %v135 = vld [vmem:[#allocation5 + $0x68] sm:$0xff]
    %v136 = vld [vmem:[#allocation5 + $0x70] sm:$0xff]
    %v137 = vld [vmem:[#allocation5 + $0x78] sm:$0xff]
    %138 = vmatpush.msra.mxu0 %v137
    %139 = vmatpush.msra.mxu0 %v136
    %140 = vmatpush.msra.mxu0 %v135
    %141 = vmatpush.msra.mxu0 %v134
    %142 = vmatpush.msra.mxu0 %v133
    %143 = vmatpush.msra.mxu0 %v132
    %144 = vmatpush.msra.mxu0 %v131
    %145 = vmatpush.msra.mxu0 %v130
    %146 = vmatpush.msra.mxu0 %v129
    %147 = vmatpush.msra.mxu0 %v128
    %148 = vmatpush.msra.mxu0 %v127
    %149 = vmatpush.msra.mxu0 %v126
    %150 = vmatpush.msra.mxu0 %v125
    %151 = vmatpush.msra.mxu0 %v124
    %152 = vmatpush.msra.mxu0 %v123
    %153 = vmatpush.msra.mxu0 %v122
    %154 = vmatmul.f32.gmra.mxu0 %v121
    %v155 = vpop.f32.mrf.mxu0
    %v156 = vadd.f32 0.0, %v155
    %157 = vdwg.mxu0
    %v158 = vmul.f32 %v156, 0.125
    %v159 = vld [vmem:[#allocation7] sm:$0xff]
    %v160 = vld [vmem:[#allocation7 + $0x8] sm:$0xff]
    %v161 = vld [vmem:[#allocation7 + $0x10] sm:$0xff]
    %v162 = vld [vmem:[#allocation7 + $0x18] sm:$0xff]
    %v163 = vld [vmem:[#allocation7 + $0x20] sm:$0xff]
    %v164 = vld [vmem:[#allocation7 + $0x28] sm:$0xff]
    %v165 = vld [vmem:[#allocation7 + $0x30] sm:$0xff]
    %v166 = vld [vmem:[#allocation7 + $0x38] sm:$0xff]
    %v167 = vld [vmem:[#allocation7 + $0x40] sm:$0xff]
    %v168 = vld [vmem:[#allocation7 + $0x48] sm:$0xff]
    %v169 = vld [vmem:[#allocation7 + $0x50] sm:$0xff]
    %v170 = vld [vmem:[#allocation7 + $0x58] sm:$0xff]
    %v171 = vld [vmem:[#allocation7 + $0x60] sm:$0xff]
    %v172 = vld [vmem:[#allocation7 + $0x68] sm:$0xff]
    %v173 = vld [vmem:[#allocation7 + $0x70] sm:$0xff]
    %v174 = vld [vmem:[#allocation7 + $0x78] sm:$0xff]
    %v175 = vld [vmem:[%s3] sm:$0x1]
    %v177 = vperm.slane %v175, 0
    %179 = vmatpush.msra.mxu0 %v174
    %180 = vmatpush.msra.mxu0 %v173
    %181 = vmatpush.msra.mxu0 %v172
    %182 = vmatpush.msra.mxu0 %v171
    %183 = vmatpush.msra.mxu0 %v170
    %184 = vmatpush.msra.mxu0 %v169
    %185 = vmatpush.msra.mxu0 %v168
    %186 = vmatpush.msra.mxu0 %v167
    %187 = vmatpush.msra.mxu0 %v166
    %188 = vmatpush.msra.mxu0 %v165
    %189 = vmatpush.msra.mxu0 %v164
    %190 = vmatpush.msra.mxu0 %v163
    %191 = vmatpush.msra.mxu0 %v162
    %192 = vmatpush.msra.mxu0 %v161
    %193 = vmatpush.msra.mxu0 %v160
    %194 = vmatpush.msra.mxu0 %v159
    %195 = vmatmul.f32.gmra.mxu0 %v158
    %v196 = vpop.f32.mrf.mxu0
    %v197 = vadd.f32 %v177, %v196
    %198 = vdwg.mxu0
    %v199 = vxor.u32 %v197, 2147483648
    %v200 = vmul.f32 %v199, 1.442695
    %v201 = vpow.pop %v200
    %v202 = vadd.f32 %v201, 1.0
    %v203 = vrcp.pop %v202
    %v204 = vmul.f32 %v202, %v203
    %v205 = vsub.f32 1.0, %v204
    %v206 = vmul.f32 %v203, %v205
    %v207 = vadd.f32 %v203, %v206
    %vm208 = vweird.f32 %v202
    %vm209 = vweird.f32 %v203
    %vm210 = vmor %vm208, %vm209
    %v211 = vsel %vm210, %v203, %v207
    %v212 = vand.u32 2147483647, %v202
    %vm213 = vcmp.eq.f32.partialorder %v212, 8.507059e+37
    %v214 = vand.u32 %v202, 2147483648
    %v215 = vor.u32 1.1754944e-38, %v214
    %v216 = vsel %vm213, %v215, %v211
    %v217 = vmul.f32 1.0, %v216
    %218 = vst [vmem:[#allocation8] sm:$0xff] %v217
    // Predicated region
    $region30: #{tpu_custom_call.1} parent=1 // pred_check
      _
    $region31: #{tpu_custom_call.1} parent=1 // pred_check_branch
      %220 = sbr.rel (0) target = $region33
    $region32: #{tpu_custom_call.1} parent=1 // pred_region
      %222 = vsyncadd [#allocation4], 0
      %s224 = sshll.u32 [#allocation8], 4
      %s225 = int_to_ptr.vmem [resolvable:$true] %s224
      %s226 = sshll.u32 %s4, 4
      %s227 = int_to_ptr.hbm [resolvable:$true] %s226
      %229 = dma.vmem_to_hbm [thread:$0]  %s225, 128, %s227, [#allocation4]
    $region33: #{tpu_custom_call.1} parent=1 // pred_fallthru
      _
    // Predicated region
    $region34: #{tpu_custom_call.1} parent=1 // pred_check
      _
    $region35: #{tpu_custom_call.1} parent=1 // pred_check_branch
      %231 = sbr.rel (0) target = $region37
    $region36: #{tpu_custom_call.1} parent=1 // pred_region
      %233 = dma.done [#allocation4], 128
    $region37: #{tpu_custom_call.1} parent=1 // pred_fallthru
      _
    %234 = vsyncpa [#allocation3], 1
    %235 = vsyncpa [#allocation6], 1
    %236 = vsyncpa [#allocation4], 1

// kernel: tpu_custom_call.1
$region0: #{tpu_custom_call.1}
  #allocation0 [shape = 'u32[]', space=smem, size = 0x4, offset = 0x4, fixed_abs, tag = 'smem constant byte address 0x4 - core index']
  #allocation1 [shape = 'u32[72,128]{1,0:T(1,128)}', space=vmem, size = 0x9000, scoped, tag = 'internal scratch']
  %s0 = inlined_call_operand.hbm [shape: s32[8,8], index: 0, kind: input, shape index: {}]
  %s1 = inlined_call_operand.hbm [shape: f32[128,128], index: 1, kind: input, shape index: {}]
  %s2 = inlined_call_operand.hbm [shape: f32[128,128], index: 2, kind: input, shape index: {}]
  %s3 = inlined_call_operand.vmem [shape: f32[1,128], index: 3, kind: input, shape index: {}]
  %s4 = inlined_call_operand.hbm [shape: f32[8,128], index: 4, kind: output, shape index: {}]
  %s5 = sld [smem:[#allocation0]]
  $region38: #{tpu_custom_call.1} parent=0
    _
  %s7 = ssub.s32 1, %s5
  %s8 = scalar_select 0, %s7, %s5
  $region1: #{tpu_custom_call.1} parent=0
    #allocation2 [shape = 'u8[4096]{0}', space=vmem, size = 0x1000, scoped, tag = 'input window, operand 0, single buffered']
    #allocation3 [shape = 's32[1]{0}', space=sflag, size = 0x4, scoped, tag = 'scoped memory for tpu_custom_call.1']
    #allocation4 [shape = 's32[1]{0}', space=sflag, size = 0x4, scoped, tag = 'scoped memory for tpu_custom_call.1']
    #allocation5 [shape = 'u8[65536]{0}', space=vmem, size = 0x10000, scoped, tag = 'input window, operand 1, single buffered']
    #allocation6 [shape = 's32[1]{0}', space=sflag, size = 0x4, scoped, tag = 'scoped memory for tpu_custom_call.1']
    #allocation7 [shape = 'u8[65536]{0}', space=vmem, size = 0x10000, scoped, tag = 'input window, operand 2, single buffered']
    #allocation8 [shape = 'u8[4096]{0}', space=vmem, size = 0x1000, scoped, tag = 'output window, operand 0, single buffered']
    %9 = vsyncpa [#allocation3], 0
    %10 = vsyncpa [#allocation6], 0
    %11 = vsyncpa [#allocation4], 0
    // Predicated region
    $region2: #{tpu_custom_call.1} parent=1 // pred_check
      _
    $region3: #{tpu_custom_call.1} parent=1 // pred_check_branch
      %13 = sbr.rel (0) target = $region5
    $region4: #{tpu_custom_call.1} parent=1 // pred_region
      %15 = vsyncadd [#allocation3], 0
      %s17 = sshll.u32 %s0, 4
      %s18 = int_to_ptr.hbm [resolvable:$true] %s17
      %s19 = sshll.u32 [#allocation2], 4
      %s20 = int_to_ptr.vmem [resolvable:$true] %s19
      %22 = dma.hbm_to_vmem [thread:$0]  %s18, 128, %s20, [#allocation3]
    $region5: #{tpu_custom_call.1} parent=1 // pred_fallthru
      _
    // Predicated region
    $region6: #{tpu_custom_call.1} parent=1 // pred_check
      _
    $region7: #{tpu_custom_call.1} parent=1 // pred_check_branch
      %24 = sbr.rel (0) target = $region9
    $region8: #{tpu_custom_call.1} parent=1 // pred_region
      %26 = vsyncadd [#allocation6], 0
      %s27 = sshll.u32 %s1, 4
      %s28 = int_to_ptr.hbm [resolvable:$true] %s27
      %s29 = sshll.u32 [#allocation5], 4
      %s30 = int_to_ptr.vmem [resolvable:$true] %s29
      %35 = dma.hbm_to_vmem [thread:$0]  %s28, 2048, %s30, [#allocation6], 128, 128, 8
    $region9: #{tpu_custom_call.1} parent=1 // pred_fallthru
      _
    // Predicated region
    $region10: #{tpu_custom_call.1} parent=1 // pred_check
      _
    $region11: #{tpu_custom_call.1} parent=1 // pred_check_branch
      %37 = sbr.rel (0) target = $region13
    $region12: #{tpu_custom_call.1} parent=1 // pred_region
      %39 = vsyncadd [#allocation6], 0
      %s40 = sshll.u32 %s2, 4
      %s41 = int_to_ptr.hbm [resolvable:$true] %s40
      %s42 = sshll.u32 [#allocation7], 4
      %s43 = int_to_ptr.vmem [resolvable:$true] %s42
      %48 = dma.hbm_to_vmem [thread:$0]  %s41, 2048, %s43, [#allocation6], 128, 128, 8
    $region13: #{tpu_custom_call.1} parent=1 // pred_fallthru
      _
    // Predicated region
    $region14: #{tpu_custom_call.1} parent=1 // pred_check
      _
    $region15: #{tpu_custom_call.1} parent=1 // pred_check_branch
      %50 = sbr.rel (0) target = $region17
    $region16: #{tpu_custom_call.1} parent=1 // pred_region
      _
    $region17: #{tpu_custom_call.1} parent=1 // pred_fallthru
      _
    // Predicated region
    $region18: #{tpu_custom_call.1} parent=1 // pred_check
      _
    $region19: #{tpu_custom_call.1} parent=1 // pred_check_branch
      %52 = sbr.rel (0) target = $region21
    $region20: #{tpu_custom_call.1} parent=1 // pred_region
      %54 = dma.done [#allocation3], 128
    $region21: #{tpu_custom_call.1} parent=1 // pred_fallthru
      _
    // Predicated region
    $region22: #{tpu_custom_call.1} parent=1 // pred_check
      _
    $region23: #{tpu_custom_call.1} parent=1 // pred_check_branch
      %56 = sbr.rel (0) target = $region25
    $region24: #{tpu_custom_call.1} parent=1 // pred_region
      %58 = dma.done [#allocation6], 2048
    $region25: #{tpu_custom_call.1} parent=1 // pred_fallthru
      _
    // Predicated region
    $region26: #{tpu_custom_call.1} parent=1 // pred_check
      _
    $region27: #{tpu_custom_call.1} parent=1 // pred_check_branch
      %60 = sbr.rel (0) target = $region29
    $region28: #{tpu_custom_call.1} parent=1 // pred_region
      %62 = dma.done [#allocation6], 2048
    $region29: #{tpu_custom_call.1} parent=1 // pred_fallthru
      _
    %v63 = vlaneseq
    %v64 = vand.u32 %v63, 127
    %v65 = vld [vmem:[#allocation2] sm:$0xff]
    %66 = vset.pattern.permute.xlu0 0
    %67 = vperm.xlu0 %66, %v65
    %v68 = vpop.permute.xlu0 %67
    %vm69 = vcmp.eq.s32.totalorder %v68, %v64
    %v70 = vsel %vm69, 1, 0
    %v71 = vcvt.s32.f32 %v70
    %v72 = vadd.f32 %v71, 0.0
    %73 = vset.pattern.permute.xlu0 1
    %74 = vperm.xlu0 %73, %v65
    %v75 = vpop.permute.xlu0 %74
    %vm76 = vcmp.eq.s32.totalorder %v75, %v64
    %v77 = vsel %vm76, 1, 0
    %v78 = vcvt.s32.f32 %v77
    %v79 = vadd.f32 %v72, %v78
    %80 = vset.pattern.permute.xlu0 2
    %81 = vperm.xlu0 %80, %v65
    %v82 = vpop.permute.xlu0 %81
    %vm83 = vcmp.eq.s32.totalorder %v82, %v64
    %v84 = vsel %vm83, 1, 0
    %v85 = vcvt.s32.f32 %v84
    %v86 = vadd.f32 %v79, %v85
    %87 = vset.pattern.permute.xlu0 3
    %88 = vperm.xlu0 %87, %v65
    %v89 = vpop.permute.xlu0 %88
    %vm90 = vcmp.eq.s32.totalorder %v89, %v64
    %v91 = vsel %vm90, 1, 0
    %v92 = vcvt.s32.f32 %v91
    %v93 = vadd.f32 %v86, %v92
    %94 = vset.pattern.permute.xlu0 4
    %95 = vperm.xlu0 %94, %v65
    %v96 = vpop.permute.xlu0 %95
    %vm97 = vcmp.eq.s32.totalorder %v96, %v64
    %v98 = vsel %vm97, 1, 0
    %v99 = vcvt.s32.f32 %v98
    %v100 = vadd.f32 %v93, %v99
    %101 = vset.pattern.permute.xlu0 5
    %102 = vperm.xlu0 %101, %v65
    %v103 = vpop.permute.xlu0 %102
    %vm104 = vcmp.eq.s32.totalorder %v103, %v64
    %v105 = vsel %vm104, 1, 0
    %v106 = vcvt.s32.f32 %v105
    %v107 = vadd.f32 %v100, %v106
    %108 = vset.pattern.permute.xlu0 6
    %109 = vperm.xlu0 %108, %v65
    %v110 = vpop.permute.xlu0 %109
    %vm111 = vcmp.eq.s32.totalorder %v110, %v64
    %v112 = vsel %vm111, 1, 0
    %v113 = vcvt.s32.f32 %v112
    %v114 = vadd.f32 %v107, %v113
    %115 = vset.pattern.permute.xlu0 7
    %116 = vperm.xlu0 %115, %v65
    %v117 = vpop.permute.xlu0 %116
    %vm118 = vcmp.eq.s32.totalorder %v117, %v64
    %v119 = vsel %vm118, 1, 0
    %v120 = vcvt.s32.f32 %v119
    %v121 = vadd.f32 %v114, %v120
    %v122 = vld [vmem:[#allocation5] sm:$0xff]
    %v123 = vld [vmem:[#allocation5 + $0x8] sm:$0xff]
    %v124 = vld [vmem:[#allocation5 + $0x10] sm:$0xff]
    %v125 = vld [vmem:[#allocation5 + $0x18] sm:$0xff]
    %v126 = vld [vmem:[#allocation5 + $0x20] sm:$0xff]
    %v127 = vld [vmem:[#allocation5 + $0x28] sm:$0xff]
    %v128 = vld [vmem:[#allocation5 + $0x30] sm:$0xff]
    %v129 = vld [vmem:[#allocation5 + $0x38] sm:$0xff]
    %v130 = vld [vmem:[#allocation5 + $0x40] sm:$0xff]
    %v131 = vld [vmem:[#allocation5 + $0x48] sm:$0xff]
    %v132 = vld [vmem:[#allocation5 + $0x50] sm:$0xff]
    %v133 = vld [vmem:[#allocation5 + $0x58] sm:$0xff]
    %v134 = vld [vmem:[#allocation5 + $0x60] sm:$0xff]
    %v135 = vld [vmem:[#allocation5 + $0x68] sm:$0xff]
    %v136 = vld [vmem:[#allocation5 + $0x70] sm:$0xff]
    %v137 = vld [vmem:[#allocation5 + $0x78] sm:$0xff]
    %138 = vmatpush.msra.mxu0 %v137
    %139 = vmatpush.msra.mxu0 %v136
    %140 = vmatpush.msra.mxu0 %v135
    %141 = vmatpush.msra.mxu0 %v134
    %142 = vmatpush.msra.mxu0 %v133
    %143 = vmatpush.msra.mxu0 %v132
    %144 = vmatpush.msra.mxu0 %v131
    %145 = vmatpush.msra.mxu0 %v130
    %146 = vmatpush.msra.mxu0 %v129
    %147 = vmatpush.msra.mxu0 %v128
    %148 = vmatpush.msra.mxu0 %v127
    %149 = vmatpush.msra.mxu0 %v126
    %150 = vmatpush.msra.mxu0 %v125
    %151 = vmatpush.msra.mxu0 %v124
    %152 = vmatpush.msra.mxu0 %v123
    %153 = vmatpush.msra.mxu0 %v122
    %154 = vmatmul.f32.gmra.mxu0 %v121
    %v155 = vpop.f32.mrf.mxu0
    %v156 = vadd.f32 0.0, %v155
    %157 = vdwg.mxu0
    %v158 = vmul.f32 %v156, 0.125
    %v159 = vld [vmem:[#allocation7] sm:$0xff]
    %v160 = vld [vmem:[#allocation7 + $0x8] sm:$0xff]
    %v161 = vld [vmem:[#allocation7 + $0x10] sm:$0xff]
    %v162 = vld [vmem:[#allocation7 + $0x18] sm:$0xff]
    %v163 = vld [vmem:[#allocation7 + $0x20] sm:$0xff]
    %v164 = vld [vmem:[#allocation7 + $0x28] sm:$0xff]
    %v165 = vld [vmem:[#allocation7 + $0x30] sm:$0xff]
    %v166 = vld [vmem:[#allocation7 + $0x38] sm:$0xff]
    %v167 = vld [vmem:[#allocation7 + $0x40] sm:$0xff]
    %v168 = vld [vmem:[#allocation7 + $0x48] sm:$0xff]
    %v169 = vld [vmem:[#allocation7 + $0x50] sm:$0xff]
    %v170 = vld [vmem:[#allocation7 + $0x58] sm:$0xff]
    %v171 = vld [vmem:[#allocation7 + $0x60] sm:$0xff]
    %v172 = vld [vmem:[#allocation7 + $0x68] sm:$0xff]
    %v173 = vld [vmem:[#allocation7 + $0x70] sm:$0xff]
    %v174 = vld [vmem:[#allocation7 + $0x78] sm:$0xff]
    %v175 = vld [vmem:[%s3] sm:$0x1]
    %v177 = vperm.slane %v175, 0
    %179 = vmatpush.msra.mxu0 %v174
    %180 = vmatpush.msra.mxu0 %v173
    %181 = vmatpush.msra.mxu0 %v172
    %182 = vmatpush.msra.mxu0 %v171
    %183 = vmatpush.msra.mxu0 %v170
    %184 = vmatpush.msra.mxu0 %v169
    %185 = vmatpush.msra.mxu0 %v168
    %186 = vmatpush.msra.mxu0 %v167
    %187 = vmatpush.msra.mxu0 %v166
    %188 = vmatpush.msra.mxu0 %v165
    %189 = vmatpush.msra.mxu0 %v164
    %190 = vmatpush.msra.mxu0 %v163
    %191 = vmatpush.msra.mxu0 %v162
    %192 = vmatpush.msra.mxu0 %v161
    %193 = vmatpush.msra.mxu0 %v160
    %194 = vmatpush.msra.mxu0 %v159
    %195 = vmatmul.f32.gmra.mxu0 %v158
    %v196 = vpop.f32.mrf.mxu0
    %v197 = vadd.f32 %v177, %v196
    %198 = vdwg.mxu0
    %v199 = vxor.u32 %v197, 2147483648
    %v200 = vmul.f32 %v199, 1.442695
    %v201 = vpow.pop %v200
    %v202 = vadd.f32 %v201, 1.0
    %v203 = vrcp.pop %v202
    %v204 = vmul.f32 %v202, %v203
    %v205 = vsub.f32 1.0, %v204
    %v206 = vmul.f32 %v203, %v205
    %v207 = vadd.f32 %v203, %v206
    %vm208 = vweird.f32 %v202
    %vm209 = vweird.f32 %v203
    %vm210 = vmor %vm208, %vm209
    %v211 = vsel %vm210, %v203, %v207
    %v212 = vand.u32 2147483647, %v202
    %vm213 = vcmp.eq.f32.partialorder %v212, 8.507059e+37
    %v214 = vand.u32 %v202, 2147483648
    %v215 = vor.u32 1.1754944e-38, %v214
    %v216 = vsel %vm213, %v215, %v211
    %v217 = vmul.f32 1.0, %v216
    %218 = vst [vmem:[#allocation8] sm:$0xff] %v217
    // Predicated region
    $region30: #{tpu_custom_call.1} parent=1 // pred_check
      _
    $region31: #{tpu_custom_call.1} parent=1 // pred_check_branch
      %220 = sbr.rel (0) target = $region33
    $region32: #{tpu_custom_call.1} parent=1 // pred_region
      %222 = vsyncadd [#allocation4], 0
      %s224 = sshll.u32 [#allocation8], 4
      %s225 = int_to_ptr.vmem [resolvable:$true] %s224
      %s226 = sshll.u32 %s4, 4
      %s227 = int_to_ptr.hbm [resolvable:$true] %s226
      %229 = dma.vmem_to_hbm [thread:$0]  %s225, 128, %s227, [#allocation4]
    $region33: #{tpu_custom_call.1} parent=1 // pred_fallthru
      _
    // Predicated region
    $region34: #{tpu_custom_call.1} parent=1 // pred_check
      _
    $region35: #{tpu_custom_call.1} parent=1 // pred_check_branch
      %231 = sbr.rel (0) target = $region37
    $region36: #{tpu_custom_call.1} parent=1 // pred_region
      %233 = dma.done [#allocation4], 128
    $region37: #{tpu_custom_call.1} parent=1 // pred_fallthru
      _
    %234 = vsyncpa [#allocation3], 1
    %235 = vsyncpa [#allocation6], 1
    %236 = vsyncpa [#allocation4], 1

</llo_original>
